<compile_context>
chip_gen: v7x
topology: tpu7x:2x2x1
jax: 0.10.0
libtpu: 0.0.40
codegen_flags: <defaults>
</compile_context>

<pallas_src>
import jax
import jax.numpy as jnp
import numpy as np
from jax.experimental import pallas as pl
from jax.experimental.pallas import tpu as pltpu


_TARGET_BLOCK_BYTES = 4 << 20   # ~4 MiB per pipelined x block (v5e/v6e/v7x safe)


# ----------------------------------------------------------------------------
# Shared-MLP + sigmoid epilogue (runs once per output block, inside the kernel)
# ----------------------------------------------------------------------------
def _mlp_epilogue(avg, mx, w1, b1, w2, b2):
    # avg/mx: (n, C); w1: (C, mid); b1: (1, mid); w2: (mid, C); b2: (1, C)
    n = avg.shape[0]
    pooled = jnp.concatenate([avg, mx], axis=0)                      # (2n, C)
    h = jnp.maximum(
        jnp.dot(pooled, w1, preferred_element_type=jnp.float32) + b1, 0.0)
    o = jnp.dot(h, w2, preferred_element_type=jnp.float32) + b2      # (2n, C)
    return jax.nn.sigmoid(o[:n] + o[n:])                             # (n, C)


# ----------------------------------------------------------------------------
# Path A: single spatial step, batch-tiled block (small H*W per row)
# ----------------------------------------------------------------------------
def _make_cam_single_kernel(hw):
    inv_hw = 1.0 / float(hw)

    def kernel(x_ref, w1_ref, b1_ref, w2_ref, b2_ref, out_ref):
        # x_ref: (TILE_B, C, HW); out_ref: (TILE_B, 1, C)
        x = x_ref[...].astype(jnp.float32)
        avg = jnp.sum(x, axis=-1) * inv_hw                   # (TILE_B, C)
        mx = jnp.max(x, axis=-1)                             # (TILE_B, C)
        att = _mlp_epilogue(avg, mx, w1_ref[...], b1_ref[...],
                            w2_ref[...], b2_ref[...])
        out_ref[...] = att.reshape(out_ref.shape)

    return kernel


# ----------------------------------------------------------------------------
# Path B: streaming spatial reduction (large H*W), lane-wide VPU accumulators
# ----------------------------------------------------------------------------
def _make_cam_stream_kernel(hw, tile_hw, needs_mask):
    inv_hw = 1.0 / float(hw)
    n_chunks = tile_hw // 128     # tile_hw is a multiple of 128 on this path

    def kernel(x_ref, w1_ref, b1_ref, w2_ref, b2_ref, out_ref,
               sum_acc, max_acc):
        # x_ref: (1, C, TILE_HW); sum_acc/max_acc: (1, C, 128) VMEM scratch
        k = pl.program_id(1)
        nk = pl.num_programs(1)

        @pl.when(k == 0)
        def _init():
            sum_acc[...] = jnp.zeros_like(sum_acc)
            max_acc[...] = jnp.full_like(max_acc, -jnp.inf)

        x = x_ref[...].astype(jnp.float32)

        def accumulate(xs, xm):
            # pure VPU adds/max over static 128-lane chunks; no per-step XLU
            s = xs[:, :, 0:128]
            m = xm[:, :, 0:128]
            for j in range(1, n_chunks):
                lo = j * 128
                s = s + xs[:, :, lo:lo + 128]
                m = jnp.maximum(m, xm[:, :, lo:lo + 128])
            sum_acc[...] += s
            max_acc[...] = jnp.maximum(max_acc[...], m)

        if needs_mask:
            @pl.when(k < nk - 1)
            def _steady():
                accumulate(x, x)

            @pl.when(k == nk - 1)
            def _tail():
                lane = jax.lax.broadcasted_iota(jnp.int32, (1, 1, tile_hw), 2)
                valid = (k * tile_hw + lane) < hw
                accumulate(jnp.where(valid, x, 0.0),
                           jnp.where(valid, x, -jnp.inf))
        else:
            accumulate(x, x)

        @pl.when(k == nk - 1)
        def _finalize():
            # single XLU lane-reduce (and relayout) for the whole reduction
            avg = jnp.sum(sum_acc[...], axis=-1) * inv_hw    # (1, C)
            mx = jnp.max(max_acc[...], axis=-1)              # (1, C)
            att = _mlp_epilogue(avg, mx, w1_ref[...], b1_ref[...],
                                w2_ref[...], b2_ref[...])
            out_ref[...] = att.reshape(out_ref.shape)

    return kernel


# ----------------------------------------------------------------------------
# Tile selection (generation-friendly: MiB-scale blocks, balanced batch axis)
# ----------------------------------------------------------------------------
def _select_tiles(B, C, HW, itemsize):
    row_bytes = C * HW * itemsize
    if row_bytes <= _TARGET_BLOCK_BYTES or HW < 256:
        # single spatial step; fatten the block with batch rows
        tile_b = max(1, min(B, _TARGET_BLOCK_BYTES // max(row_bytes, 1)))
        if B > 1:
            # keep >= 2 blocks on the parallel axis (v7x dual-TC balance)
            tile_b = min(tile_b, (B + 1) // 2)
        return int(tile_b), HW
    # stream over the spatial axis with 128-multiple lane tiles
    max_lanes = max(128, (_TARGET_BLOCK_BYTES // (C * itemsize)) // 128 * 128)
    start = max(128, min(max_lanes, (HW // 128) * 128))
    tile_hw = None
    for cand in range(start, 0, -128):        # prefer a divisor of HW
        if HW % cand == 0:
            tile_hw = cand
            break
    if tile_hw is None:
        tile_hw = start                       # masked last tile
    return 1, int(tile_hw)


# ----------------------------------------------------------------------------
# Wrapper
# ----------------------------------------------------------------------------
def channel_attention_forward(x, params, *, tile_hw=None, tile_b=None):
    """x: (B, C, H, W) float.  params: PyTorch-layout Linear weights/biases.
    Returns the (B, C, 1, 1) sigmoid channel-attention map (f32).
    tile_hw / tile_b override the automatic tiling (tile_hw must equal H*W or
    be a multiple of 128; when streaming over H*W, tile_b is forced to 1)."""
    B, C, H, W = x.shape
    HW = H * W
    mid = params["w1"].shape[0]
    itemsize = jnp.dtype(x.dtype).itemsize

    auto_b, auto_hw = _select_tiles(B, C, HW, itemsize)
    tile_hw = auto_hw if tile_hw is None else min(int(tile_hw), HW)
    if tile_hw != HW and tile_hw % 128 != 0:
        raise ValueError("tile_hw must equal H*W or be a multiple of 128")
    if tile_hw == HW:
        tb = auto_b if tile_b is None else int(tile_b)
        tile_b = max(1, min(tb, B))
    else:
        tile_b = 1
    n_hw = pl.cdiv(HW, tile_hw)
    nb = pl.cdiv(B, tile_b)
    needs_mask = (HW % tile_hw) != 0

    # glue: flatten spatial, pre-transpose Linear weights to [in, out]
    x_flat = x.reshape(B, C, HW)
    w1_t = jnp.asarray(params["w1"], jnp.float32).T        # (C, mid)
    w2_t = jnp.asarray(params["w2"], jnp.float32).T        # (mid, C)
    b1_2 = jnp.asarray(params["b1"], jnp.float32).reshape(1, mid)
    b2_2 = jnp.asarray(params["b2"], jnp.float32).reshape(1, C)

    # explicit VMEM budget: 2x double-buffered x block + weights + out + accs
    block_bytes = tile_b * C * tile_hw * itemsize
    weight_bytes = 4 * (C * mid + mid + mid * C + C)
    acc_bytes = (2 * tile_b * C * 128 * 4) if n_hw > 1 else 0
    out_bytes = 4 * tile_b * C
    vmem_limit = int(min(max(2 * block_bytes + 2 * weight_bytes +
                             2 * out_bytes + acc_bytes + (4 << 20),
                             16 << 20), 64 << 20))

    if n_hw == 1:
        out = pl.pallas_call(
            _make_cam_single_kernel(HW),
            out_shape=jax.ShapeDtypeStruct((B, 1, C), jnp.float32),
            grid=(nb,),
            in_specs=[
                pl.BlockSpec((tile_b, C, HW), lambda b: (b, 0, 0)),
                pl.BlockSpec((C, mid), lambda b: (0, 0)),
                pl.BlockSpec((1, mid), lambda b: (0, 0)),
                pl.BlockSpec((mid, C), lambda b: (0, 0)),
                pl.BlockSpec((1, C), lambda b: (0, 0)),
            ],
            out_specs=pl.BlockSpec((tile_b, 1, C), lambda b: (b, 0, 0)),
            compiler_params=pltpu.CompilerParams(
                dimension_semantics=("parallel",),
                vmem_limit_bytes=vmem_limit),
        )(x_flat, w1_t, b1_2, w2_t, b2_2)
    else:
        out = pl.pallas_call(
            _make_cam_stream_kernel(HW, tile_hw, needs_mask),
            out_shape=jax.ShapeDtypeStruct((B, 1, C), jnp.float32),
            grid=(B, n_hw),
            in_specs=[
                pl.BlockSpec((1, C, tile_hw), lambda b, k: (b, 0, k)),
                pl.BlockSpec((C, mid), lambda b, k: (0, 0)),
                pl.BlockSpec((1, mid), lambda b, k: (0, 0)),
                pl.BlockSpec((mid, C), lambda b, k: (0, 0)),
                pl.BlockSpec((1, C), lambda b, k: (0, 0)),
            ],
            out_specs=pl.BlockSpec((1, 1, C), lambda b, k: (b, 0, 0)),
            scratch_shapes=[pltpu.VMEM((1, C, 128), jnp.float32),   # sum acc
                            pltpu.VMEM((1, C, 128), jnp.float32)],  # max acc
            compiler_params=pltpu.CompilerParams(
                dimension_semantics=("parallel", "arbitrary"),
                vmem_limit_bytes=vmem_limit),
        )(x_flat, w1_t, b1_2, w2_t, b2_2)

    return out.reshape(B, C, 1, 1)


# ----------------------------------------------------------------------------
# Pure-JAX reference (mirrors the PyTorch forward exactly)
# ----------------------------------------------------------------------------
def channel_attention_ref(x, params):
    avg = jnp.mean(x, axis=(2, 3))             # AdaptiveAvgPool2d(1).view(B,-1)
    mx = jnp.max(x, axis=(2, 3))               # AdaptiveMaxPool2d(1).view(B,-1)

    def mlp(v):
        h = jnp.maximum(v @ params["w1"].T + params["b1"], 0.0)
        return h @ params["w2"].T + params["b2"]

    out = jax.nn.sigmoid(mlp(avg) + mlp(mx))
    return out[:, :, None, None]


if __name__ == "__main__":
    B, C, H, W = 2, 32, 16, 16
    reduction = 16
    mid = C // reduction                        # 2

    key = jax.random.PRNGKey(0)
    kx, k1, k2, k3, k4, kx2 = jax.random.split(key, 6)

    x = jax.random.normal(kx, (B, C, H, W), jnp.float32)
    params = {
        # PyTorch nn.Linear layout: weight (out_features, in_features)
        "w1": jax.random.normal(k1, (mid, C), jnp.float32) * 0.2,
        "b1": jax.random.normal(k2, (mid,), jnp.float32) * 0.1,
        "w2": jax.random.normal(k3, (C, mid), jnp.float32) * 0.2,
        "b2": jax.random.normal(k4, (C,), jnp.float32) * 0.1,
    }

    ref = channel_attention_ref(x, params)

    # 1) automatic tiling: single-step path, batch axis parallel
    out = channel_attention_forward(x, params)
    jax.block_until_ready(out)
    np.testing.assert_allclose(np.asarray(out), np.asarray(ref),
                               rtol=1e-4, atol=1e-4)

    # 2) forced batch tile of 2: whole batch in one (2, C, HW) block
    out_b = channel_attention_forward(x, params, tile_b=2)
    jax.block_until_ready(out_b)
    np.testing.assert_allclose(np.asarray(out_b), np.asarray(ref),
                               rtol=1e-4, atol=1e-4)

    # 3) forced streaming path (HW=256, tile 128 -> 2 pipelined steps)
    out_s = channel_attention_forward(x, params, tile_hw=128)
    jax.block_until_ready(out_s)
    np.testing.assert_allclose(np.asarray(out_s), np.asarray(ref),
                               rtol=1e-4, atol=1e-4)

    # 4) masked-remainder streaming path (HW=144, tile 128 -> partial last tile)
    x2 = jax.random.normal(kx2, (B, C, 12, 12), jnp.float32)
    ref2 = channel_attention_ref(x2, params)
    out2 = channel_attention_forward(x2, params, tile_hw=128)
    jax.block_until_ready(out2)
    np.testing.assert_allclose(np.asarray(out2), np.asarray(ref2),
                               rtol=1e-4, atol=1e-4)

    print("KERNEL_OK")
</pallas_src>

<mosaic_0001>
module attributes {stable_mosaic.version = 11 : i64} {
  func.func @kernel(%arg0: i32, %arg1: memref<1x32x256xf32, #tpu.memory_space<vmem>>, %arg2: memref<32x2xf32, #tpu.memory_space<vmem>>, %arg3: memref<1x2xf32, #tpu.memory_space<vmem>>, %arg4: memref<2x32xf32, #tpu.memory_space<vmem>>, %arg5: memref<1x32xf32, #tpu.memory_space<vmem>>, %arg6: memref<1x1x32xf32, #tpu.memory_space<vmem>>) attributes {dimension_semantics = [#tpu.dimension_semantics<parallel>], iteration_bounds = array<i64: 2>, scalar_prefetch = 0 : i64, scratch_operands = 0 : i64, tpu.core_type = #tpu.core_type<tc>, window_params = [{transform_indices = @transform_0, window_bounds = array<i64: 1, 32, 256>}, {pipeline_mode = #tpu.pipeline_mode<synchronous>, transform_indices = @transform_1, window_bounds = array<i64: 32, 2>}, {pipeline_mode = #tpu.pipeline_mode<synchronous>, transform_indices = @transform_2, window_bounds = array<i64: 1, 2>}, {pipeline_mode = #tpu.pipeline_mode<synchronous>, transform_indices = @transform_3, window_bounds = array<i64: 2, 32>}, {pipeline_mode = #tpu.pipeline_mode<synchronous>, transform_indices = @transform_4, window_bounds = array<i64: 1, 32>}, {transform_indices = @transform_5, window_bounds = array<i64: 1, 1, 32>}]} {
    %c0 = arith.constant 0 : index
    %c0_0 = arith.constant 0 : index
    %c0_1 = arith.constant 0 : index
    %0 = vector.load %arg1[%c0, %c0_0, %c0_1] : memref<1x32x256xf32, #tpu.memory_space<vmem>>, vector<1x32x256xf32>
    %cst = arith.constant dense<0.000000e+00> : vector<1x32xf32>
    %1 = vector.multi_reduction <add>, %0, %cst [2] : vector<1x32x256xf32> to vector<1x32xf32>
    %cst_2 = arith.constant 3.906250e-03 : f32
    %2 = vector.broadcast %cst_2 : f32 to vector<1x32xf32>
    %3 = arith.mulf %1, %2 : vector<1x32xf32>
    %cst_3 = arith.constant dense<0xFF800000> : vector<1x32xf32>
    %4 = vector.multi_reduction <maximumf>, %0, %cst_3 [2] : vector<1x32x256xf32> to vector<1x32xf32>
    %c0_4 = arith.constant 0 : index
    %c0_5 = arith.constant 0 : index
    %5 = vector.load %arg2[%c0_4, %c0_5] : memref<32x2xf32, #tpu.memory_space<vmem>>, vector<32x2xf32>
    %c0_6 = arith.constant 0 : index
    %c0_7 = arith.constant 0 : index
    %6 = vector.load %arg3[%c0_6, %c0_7] : memref<1x2xf32, #tpu.memory_space<vmem>>, vector<1x2xf32>
    %c0_8 = arith.constant 0 : index
    %c0_9 = arith.constant 0 : index
    %7 = vector.load %arg4[%c0_8, %c0_9] : memref<2x32xf32, #tpu.memory_space<vmem>>, vector<2x32xf32>
    %c0_10 = arith.constant 0 : index
    %c0_11 = arith.constant 0 : index
    %8 = vector.load %arg5[%c0_10, %c0_11] : memref<1x32xf32, #tpu.memory_space<vmem>>, vector<1x32xf32>
    %9 = tpu.concatenate %3, %4 in 0 : vector<1x32xf32>, vector<1x32xf32> -> vector<2x32xf32>
    %cst_12 = arith.constant dense<0.000000e+00> : vector<2x2xf32>
    %10 = tpu.matmul %9, %5, %cst_12 {dimension_numbers = #tpu.dot_dimension_numbers<[1], [0], [0], [1], [0, 0, 1, 1], [], []>} : vector<2x32xf32>, vector<32x2xf32>, vector<2x2xf32> -> vector<2x2xf32>
    %11 = vector.broadcast %6 : vector<1x2xf32> to vector<2x2xf32>
    %12 = arith.addf %10, %11 : vector<2x2xf32>
    %cst_13 = arith.constant 0.000000e+00 : f32
    %13 = vector.broadcast %cst_13 : f32 to vector<2x2xf32>
    %14 = arith.maximumf %12, %13 : vector<2x2xf32>
    %cst_14 = arith.constant dense<0.000000e+00> : vector<2x32xf32>
    %15 = tpu.matmul %14, %7, %cst_14 {dimension_numbers = #tpu.dot_dimension_numbers<[1], [0], [0], [1], [0, 0, 1, 1], [], []>} : vector<2x2xf32>, vector<2x32xf32>, vector<2x32xf32> -> vector<2x32xf32>
    %16 = vector.broadcast %8 : vector<1x32xf32> to vector<2x32xf32>
    %17 = arith.addf %15, %16 : vector<2x32xf32>
    %18 = vector.extract_strided_slice %17 {offsets = [0, 0], sizes = [1, 32], strides = [1, 1]} : vector<2x32xf32> to vector<1x32xf32>
    %19 = vector.extract_strided_slice %17 {offsets = [1, 0], sizes = [1, 32], strides = [1, 1]} : vector<2x32xf32> to vector<1x32xf32>
    %20 = arith.addf %18, %19 : vector<1x32xf32>
    %21 = arith.negf %20 : vector<1x32xf32>
    %22 = math.exp %21 : vector<1x32xf32>
    %cst_15 = arith.constant 1.000000e+00 : f32
    %23 = vector.broadcast %cst_15 : f32 to vector<1x32xf32>
    %24 = arith.addf %23, %22 : vector<1x32xf32>
    %25 = arith.divf %23, %24 : vector<1x32xf32>
    %26 = vector.shape_cast %25 : vector<1x32xf32> to vector<1x1x32xf32>
    %c0_16 = arith.constant 0 : index
    %c0_17 = arith.constant 0 : index
    %c0_18 = arith.constant 0 : index
    %27 = vector.load %arg6[%c0_16, %c0_17, %c0_18] : memref<1x1x32xf32, #tpu.memory_space<vmem>>, vector<1x1x32xf32>
    tpu.vector_store %arg6[%c0_16, %c0_17, %c0_18], %26 {strides = array<i32>} : memref<1x1x32xf32, #tpu.memory_space<vmem>>, vector<1x1x32xf32>,
    return
  }
  func.func @transform_0(%arg0: i32) -> (i32, i32, i32) {
    %c0_i32 = arith.constant 0 : i32
    %c0_i32_0 = arith.constant 0 : i32
    %c0_i32_1 = arith.constant 0 : i32
    return %arg0, %c0_i32, %c0_i32_0 : i32, i32, i32
  }
  func.func @transform_1(%arg0: i32) -> (i32, i32) {
    %c0_i32 = arith.constant 0 : i32
    %c0_i32_0 = arith.constant 0 : i32
    %c0_i32_1 = arith.constant 0 : i32
    return %c0_i32, %c0_i32_0 : i32, i32
  }
  func.func @transform_2(%arg0: i32) -> (i32, i32) {
    %c0_i32 = arith.constant 0 : i32
    %c0_i32_0 = arith.constant 0 : i32
    %c0_i32_1 = arith.constant 0 : i32
    return %c0_i32, %c0_i32_0 : i32, i32
  }
  func.func @transform_3(%arg0: i32) -> (i32, i32) {
    %c0_i32 = arith.constant 0 : i32
    %c0_i32_0 = arith.constant 0 : i32
    %c0_i32_1 = arith.constant 0 : i32
    return %c0_i32, %c0_i32_0 : i32, i32
  }
  func.func @transform_4(%arg0: i32) -> (i32, i32) {
    %c0_i32 = arith.constant 0 : i32
    %c0_i32_0 = arith.constant 0 : i32
    %c0_i32_1 = arith.constant 0 : i32
    return %c0_i32, %c0_i32_0 : i32, i32
  }
  func.func @transform_5(%arg0: i32) -> (i32, i32, i32) {
    %c0_i32 = arith.constant 0 : i32
    %c0_i32_0 = arith.constant 0 : i32
    %c0_i32_1 = arith.constant 0 : i32
    return %arg0, %c0_i32, %c0_i32_0 : i32, i32, i32
  }
}

</mosaic_0001>

<llo_original>
// kernel: tpu_custom_call.1
$region0: #{tpu_custom_call.1}
  #allocation0 [shape = 'u32[]', space=smem, size = 0x4, offset = 0x4, fixed_abs, tag = 'smem constant byte address 0x4 - core index']
  #allocation1 [shape = 'u32[144,128]{1,0:T(1,128)}', space=vmem, size = 0x12000, scoped, tag = 'internal scratch']
  %s0 = inlined_call_operand.hbm [shape: f32[2,32,256], index: 0, kind: input, shape index: {}]
  %s1 = inlined_call_operand.vmem [shape: f32[32,2], index: 1, kind: input, shape index: {}]
  %s2 = inlined_call_operand.vmem [shape: f32[1,2], index: 2, kind: input, shape index: {}]
  %s3 = inlined_call_operand.vmem [shape: f32[2,32], index: 3, kind: input, shape index: {}]
  %s4 = inlined_call_operand.vmem [shape: f32[1,32], index: 4, kind: input, shape index: {}]
  %s5 = inlined_call_operand.hbm [shape: f32[2,1,32], index: 5, kind: output, shape index: {}]
  %s6 = sld [smem:[#allocation0]]
  $region57: #{tpu_custom_call.1} parent=0
    _
  %s8 = ssub.s32 1, %s6
  %s9 = scalar_select 0, %s8, %s6
  $region1: #{tpu_custom_call.1} parent=0
    #allocation2 [shape = 'u8[65536]{0}', space=vmem, size = 0x10000, scoped, tag = 'input window, operand 0']
    #allocation3 [shape = 's32[2]{0}', space=sflag, size = 0x8, scoped, tag = 'scoped memory for tpu_custom_call.1']
    #allocation4 [shape = 's32[2]{0}', space=sflag, size = 0x8, scoped, tag = 'scoped memory for tpu_custom_call.1']
    #allocation5 [shape = 'u8[1024]{0}', space=vmem, size = 0x400, scoped, tag = 'output window, operand 0']
    %10 = vsyncpa [#allocation3], 0
    %s11 = scalar_lea.sflag [#allocation3], 1
    %12 = vsyncpa %s11, 0
    %13 = vsyncpa [#allocation4], 0
    %s14 = scalar_lea.sflag [#allocation4], 1
    %15 = vsyncpa %s14, 0
    loop: start=0, step=1, limit=4
    $region2: #{tpu_custom_call.1} parent=1 // loop_pre_header
      _
    $region3: #{tpu_custom_call.1} parent=1 // loop_header
      %s17 = sphi 0, %s21
      %p18 = scmp.ge.s32.totalorder %s17, 4
      %s27 = sphi 0, %s29
      %s30 = sphi 0, %s27
      %s31 = sphi 0, %s30
      %s47 = sphi 0, %s31
      %s51 = sphi 0, %s51
      %s53 = sphi 0, %s51
      %s54 = sphi 0, %s53
      %s68 = sphi 0, %s54
      %s72 = sphi 0, %s72
      %s74 = sphi 0, %s72
      %s75 = sphi 0, %s74
      %s89 = sphi 0, %s75
      %s93 = sphi 0, %s93
      %s95 = sphi 0, %s93
      %s96 = sphi 0, %s95
      %s110 = sphi 0, %s96
      %s114 = sphi 0, %s114
      %s116 = sphi 0, %s114
      %s117 = sphi 0, %s116
      %s131 = sphi 0, %s117
      %s137 = sphi 0, %s139
      %s140 = sphi 0, %s137
      %s141 = sphi 0, %s140
      %s157 = sphi 0, %s141
    $region4: #{tpu_custom_call.1} parent=1 // loop_header_branch
      %20 = sbr.rel (%p18) target = $region8
    $region5: #{tpu_custom_call.1} parent=1 // loop_body
      %s22 = ssub.s32 %s17, 1
      %s23 = ssub.s32 %s17, 2
      %s24 = sadd.s32 %s17, 1
      %s25 = ssub.s32 %s17, %s24
      %p26 = scmp.eq.s32.totalorder %s25, 0
      %s28 = sadd.s32 %s27, 1
      %s29 = scalar_select %p26, %s27, %s28
      %p32 = pneg %p26
      %p33 = scmp.eq.s32.totalorder %s17, 1
      %p34 = por %p32, %p33
      %p35 = scmp.ne.s32.totalorder %s27, %s30
      %p36 = scmp.eq.s32.totalorder %s17, 0
      %p37 = por %p35, %p36
      %p38 = scmp.ne.s32.totalorder %s27, %s30
      %p39 = scmp.eq.s32.totalorder %s22, 1
      %p40 = por %p38, %p39
      %p41 = scmp.ne.s32.totalorder %s30, %s31
      %p42 = scmp.eq.s32.totalorder %s22, 0
      %p43 = por %p41, %p42
      %p44 = scmp.ne.s32.totalorder %s30, %s31
      %p45 = scmp.eq.s32.totalorder %s23, 1
      %p46 = por %p44, %p45
      %p48 = scmp.ne.s32.totalorder %s31, %s47
      %p49 = scmp.eq.s32.totalorder %s23, 0
      %p50 = por %p48, %p49
      %s52 = sadd.s32 %s51, 1
      %p55 = scmp.eq.s32.totalorder %s17, 1
      %p56 = scmp.ne.s32.totalorder %s51, %s53
      %p57 = scmp.eq.s32.totalorder %s17, 0
      %p58 = por %p56, %p57
      %p59 = scmp.ne.s32.totalorder %s51, %s53
      %p60 = scmp.eq.s32.totalorder %s22, 1
      %p61 = por %p59, %p60
      %p62 = scmp.ne.s32.totalorder %s53, %s54
      %p63 = scmp.eq.s32.totalorder %s22, 0
      %p64 = por %p62, %p63
      %p65 = scmp.ne.s32.totalorder %s53, %s54
      %p66 = scmp.eq.s32.totalorder %s23, 1
      %p67 = por %p65, %p66
      %p69 = scmp.ne.s32.totalorder %s54, %s68
      %p70 = scmp.eq.s32.totalorder %s23, 0
      %p71 = por %p69, %p70
      %s73 = sadd.s32 %s72, 1
      %p76 = scmp.eq.s32.totalorder %s17, 1
      %p77 = scmp.ne.s32.totalorder %s72, %s74
      %p78 = scmp.eq.s32.totalorder %s17, 0
      %p79 = por %p77, %p78
      %p80 = scmp.ne.s32.totalorder %s72, %s74
      %p81 = scmp.eq.s32.totalorder %s22, 1
      %p82 = por %p80, %p81
      %p83 = scmp.ne.s32.totalorder %s74, %s75
      %p84 = scmp.eq.s32.totalorder %s22, 0
      %p85 = por %p83, %p84
      %p86 = scmp.ne.s32.totalorder %s74, %s75
      %p87 = scmp.eq.s32.totalorder %s23, 1
      %p88 = por %p86, %p87
      %p90 = scmp.ne.s32.totalorder %s75, %s89
      %p91 = scmp.eq.s32.totalorder %s23, 0
      %p92 = por %p90, %p91
      %s94 = sadd.s32 %s93, 1
      %p97 = scmp.eq.s32.totalorder %s17, 1
      %p98 = scmp.ne.s32.totalorder %s93, %s95
      %p99 = scmp.eq.s32.totalorder %s17, 0
      %p100 = por %p98, %p99
      %p101 = scmp.ne.s32.totalorder %s93, %s95
      %p102 = scmp.eq.s32.totalorder %s22, 1
      %p103 = por %p101, %p102
      %p104 = scmp.ne.s32.totalorder %s95, %s96
      %p105 = scmp.eq.s32.totalorder %s22, 0
      %p106 = por %p104, %p105
      %p107 = scmp.ne.s32.totalorder %s95, %s96
      %p108 = scmp.eq.s32.totalorder %s23, 1
      %p109 = por %p107, %p108
      %p111 = scmp.ne.s32.totalorder %s96, %s110
      %p112 = scmp.eq.s32.totalorder %s23, 0
      %p113 = por %p111, %p112
      %s115 = sadd.s32 %s114, 1
      %p118 = scmp.eq.s32.totalorder %s17, 1
      %p119 = scmp.ne.s32.totalorder %s114, %s116
      %p120 = scmp.eq.s32.totalorder %s17, 0
      %p121 = por %p119, %p120
      %p122 = scmp.ne.s32.totalorder %s114, %s116
      %p123 = scmp.eq.s32.totalorder %s22, 1
      %p124 = por %p122, %p123
      %p125 = scmp.ne.s32.totalorder %s116, %s117
      %p126 = scmp.eq.s32.totalorder %s22, 0
      %p127 = por %p125, %p126
      %p128 = scmp.ne.s32.totalorder %s116, %s117
      %p129 = scmp.eq.s32.totalorder %s23, 1
      %p130 = por %p128, %p129
      %p132 = scmp.ne.s32.totalorder %s117, %s131
      %p133 = scmp.eq.s32.totalorder %s23, 0
      %p134 = por %p132, %p133
      %s135 = ssub.s32 %s17, %s24
      %p136 = scmp.eq.s32.totalorder %s135, 0
      %s138 = sadd.s32 %s137, 1
      %s139 = scalar_select %p136, %s137, %s138
      %p142 = pneg %p136
      %p143 = scmp.eq.s32.totalorder %s17, 1
      %p144 = por %p142, %p143
      %p145 = scmp.ne.s32.totalorder %s137, %s140
      %p146 = scmp.eq.s32.totalorder %s17, 0
      %p147 = por %p145, %p146
      %p148 = scmp.ne.s32.totalorder %s137, %s140
      %p149 = scmp.eq.s32.totalorder %s22, 1
      %p150 = por %p148, %p149
      %p151 = scmp.ne.s32.totalorder %s140, %s141
      %p152 = scmp.eq.s32.totalorder %s22, 0
      %p153 = por %p151, %p152
      %p154 = scmp.ne.s32.totalorder %s140, %s141
      %p155 = scmp.eq.s32.totalorder %s23, 1
      %p156 = por %p154, %p155
      %p158 = scmp.ne.s32.totalorder %s141, %s157
      %p159 = scmp.eq.s32.totalorder %s23, 0
      %p160 = por %p158, %p159
      %p161 = scmp.le.s32.totalorder 1, %s17
      %p162 = scmp.lt.s32.totalorder %s17, 3
      %p163 = pnand %p161, %p162
      %p164 = pneg %p163
      // Predicated region
      $region9: #{tpu_custom_call.1} parent=5 // pred_check
        _
      $region10: #{tpu_custom_call.1} parent=5 // pred_check_branch
        %166 = sbr.rel (%p163) target = $region12
      $region11: #{tpu_custom_call.1} parent=5 // pred_region
        %s167 = ssub.s32 %s17, 1
        // Predicated region
        $region13: #{tpu_custom_call.1} parent=11 // pred_check
          %p168 = pneg %p64
        $region14: #{tpu_custom_call.1} parent=11 // pred_check_branch
          %170 = sbr.rel (%p168) target = $region16
        $region15: #{tpu_custom_call.1} parent=11 // pred_region
          _
        $region16: #{tpu_custom_call.1} parent=11 // pred_fallthru
          _
        // Predicated region
        $region17: #{tpu_custom_call.1} parent=11 // pred_check
          %p171 = pneg %p85
        $region18: #{tpu_custom_call.1} parent=11 // pred_check_branch
          %173 = sbr.rel (%p171) target = $region20
        $region19: #{tpu_custom_call.1} parent=11 // pred_region
          _
        $region20: #{tpu_custom_call.1} parent=11 // pred_fallthru
          _
        // Predicated region
        $region21: #{tpu_custom_call.1} parent=11 // pred_check
          %p174 = pneg %p106
        $region22: #{tpu_custom_call.1} parent=11 // pred_check_branch
          %176 = sbr.rel (%p174) target = $region24
        $region23: #{tpu_custom_call.1} parent=11 // pred_region
          _
        $region24: #{tpu_custom_call.1} parent=11 // pred_fallthru
          _
        // Predicated region
        $region25: #{tpu_custom_call.1} parent=11 // pred_check
          %p177 = pneg %p127
        $region26: #{tpu_custom_call.1} parent=11 // pred_check_branch
          %179 = sbr.rel (%p177) target = $region28
        $region27: #{tpu_custom_call.1} parent=11 // pred_region
          _
        $region28: #{tpu_custom_call.1} parent=11 // pred_fallthru
          _
      $region12: #{tpu_custom_call.1} parent=5 // pred_fallthru
        _
      %p180 = scmp.lt.s32.totalorder %s17, 2
      // Predicated region
      $region29: #{tpu_custom_call.1} parent=5 // pred_check
        %p181 = pneg %p180
      $region30: #{tpu_custom_call.1} parent=5 // pred_check_branch
        %183 = sbr.rel (%p181) target = $region32
      $region31: #{tpu_custom_call.1} parent=5 // pred_region
        // Predicated region
        $region33: #{tpu_custom_call.1} parent=31 // pred_check
          %p184 = pneg %p37
        $region34: #{tpu_custom_call.1} parent=31 // pred_check_branch
          %186 = sbr.rel (%p184) target = $region36
        $region35: #{tpu_custom_call.1} parent=31 // pred_region
          %s187 = sand.u32 %s27, 1
          %s188 = scalar_lea.sflag [#allocation3], %s187
          %s189 = sand.u32 %s27, 1
          %s190 = smul.addr %s189, 64
          %s191 = scalar_lea.vmem [#allocation2], %s190
          %s193 = ssub.s32 1024, 1024
          %194 = vsyncadd %s188, %s193
          %s195 = smul.addr %s17, 8
          %s196 = smul.addr %s195, 128
          %s197 = scalar_lea.hbm %s0, %s196
          %s198 = sshll.u32 %s191, 4
          %s199 = int_to_ptr.vmem [resolvable:$true] %s198
          %204 = dma.hbm_to_vmem [thread:$0]  %s197, 1024, %s199, %s188, 256, 256, 16
        $region36: #{tpu_custom_call.1} parent=31 // pred_fallthru
          _
      $region32: #{tpu_custom_call.1} parent=5 // pred_fallthru
        _
      %p205 = scmp.le.s32.totalorder 1, %s17
      %p206 = scmp.lt.s32.totalorder %s17, 3
      %p207 = pnand %p205, %p206
      %p208 = pneg %p207
      // Predicated region
      $region37: #{tpu_custom_call.1} parent=5 // pred_check
        _
      $region38: #{tpu_custom_call.1} parent=5 // pred_check_branch
        %210 = sbr.rel (%p207) target = $region40
      $region39: #{tpu_custom_call.1} parent=5 // pred_region
        %s211 = ssub.s32 %s17, 1
        %s212 = sand.u32 %s30, 1
        %s213 = scalar_lea.sflag [#allocation3], %s212
        %s214 = sand.u32 %s30, 1
        %s215 = smul.addr %s214, 64
        %s216 = scalar_lea.vmem [#allocation2], %s215
        // Predicated region
        $region41: #{tpu_custom_call.1} parent=39 // pred_check
          %p217 = pneg %p43
        $region42: #{tpu_custom_call.1} parent=39 // pred_check_branch
          %219 = sbr.rel (%p217) target = $region44
        $region43: #{tpu_custom_call.1} parent=39 // pred_region
          %220 = dma.done %s213, 1024
        $region44: #{tpu_custom_call.1} parent=39 // pred_fallthru
          _
        %s221 = sand.u32 %s30, 1
        %s222 = scalar_lea.sflag [#allocation3], %s221
        %s223 = sand.u32 %s30, 1
        %s224 = smul.addr %s223, 64
        %s225 = scalar_lea.vmem [#allocation2], %s224
        %p226 = pneg %p43
        %p227 = pneg %p40
        %p228 = pneg %p64
        %p229 = pneg %p61
        %p230 = pneg %p85
        %p231 = pneg %p82
        %p232 = pneg %p106
        %p233 = pneg %p103
        %p234 = pneg %p127
        %p235 = pneg %p124
        %p236 = pneg %p153
        %p237 = pneg %p150
        %s238 = sand.u32 %s140, 1
        %s239 = scalar_lea.sflag [#allocation4], %s238
        %s240 = sand.u32 %s140, 1
        %s241 = scalar_lea.vmem [#allocation5], %s240
        %v242 = vld [vmem:[%s216] sm:$0xff]
        %v243 = vld [vmem:[%s216 + $0x8] sm:$0xff]
        %v244 = vld [vmem:[%s216 + $0x10] sm:$0xff]
        %v245 = vld [vmem:[%s216 + $0x18] sm:$0xff]
        %v246 = vld [vmem:[%s216 + $0x20] sm:$0xff]
        %v247 = vld [vmem:[%s216 + $0x28] sm:$0xff]
        %v248 = vld [vmem:[%s216 + $0x30] sm:$0xff]
        %v249 = vld [vmem:[%s216 + $0x38] sm:$0xff]
        %v250 = vadd.f32 %v242, %v243
        %251 = vadd.xlane.f32.xlu0 %v250
        %v252 = vpop.xlane.xlu0 %251
        %v253 = vadd.f32 %v244, %v245
        %254 = vadd.xlane.f32.xlu0 %v253
        %v255 = vpop.xlane.xlu0 %254
        %v256 = vadd.f32 %v246, %v247
        %257 = vadd.xlane.f32.xlu0 %v256
        %v258 = vpop.xlane.xlu0 %257
        %v259 = vadd.f32 %v248, %v249
        %260 = vadd.xlane.f32.xlu0 %v259
        %v261 = vpop.xlane.xlu0 %260
        %v262 = vmul.f32 %v252, 0.00390625
        %v263 = vmul.f32 %v255, 0.00390625
        %v264 = vmul.f32 %v258, 0.00390625
        %v265 = vmul.f32 %v261, 0.00390625
        %v266 = vmax.f32 %v242, %v243
        %267 = vmax.xlane.f32.xlu0 %v266
        %v268 = vpop.xlane.xlu0 %267
        %v269 = vmax.f32 %v244, %v245
        %270 = vmax.xlane.f32.xlu0 %v269
        %v271 = vpop.xlane.xlu0 %270
        %v272 = vmax.f32 %v246, %v247
        %273 = vmax.xlane.f32.xlu0 %v272
        %v274 = vpop.xlane.xlu0 %273
        %v275 = vmax.f32 %v248, %v249
        %276 = vmax.xlane.f32.xlu0 %v275
        %v277 = vpop.xlane.xlu0 %276
        %v278 = vld [vmem:[%s1] sm:$0xff]
        %v279 = vld [vmem:[%s1 + $0x8] sm:$0xff]
        %v280 = vld [vmem:[%s1 + $0x10] sm:$0xff]
        %v281 = vld [vmem:[%s1 + $0x18] sm:$0xff]
        %v282 = vld [vmem:[%s2] sm:$0x1]
        %v283 = vld [vmem:[%s3] sm:$0x3]
        %v284 = vld [vmem:[%s4] sm:$0x1]
        %v289 = vlaneseq
        %v290 = vand.u32 %v289, 127
        %v291 = vlaneseq
        %v292 = vshrl.u32 %v291, 7
        %v293 = vsub.s32 %v290, %v292
        %v294 = vrot.slane %v262, %v293
        %v295 = vadd.s32 %v290, 4294967288
        %v296 = vlaneseq
        %v297 = vshrl.u32 %v296, 7
        %v298 = vsub.s32 %v295, %v297
        %v299 = vrot.slane %v263, %v298
        %vm300 = vcmask 130112
        %v301 = vsel %vm300, %v299, %v294
        %v302 = vadd.s32 %v290, 4294967280
        %v303 = vlaneseq
        %v304 = vshrl.u32 %v303, 7
        %v305 = vsub.s32 %v302, %v304
        %v306 = vrot.slane %v264, %v305
        %vm307 = vcmask 195712
        %v308 = vsel %vm307, %v306, %v301
        %v309 = vadd.s32 %v290, 4294967272
        %v310 = vlaneseq
        %v311 = vshrl.u32 %v310, 7
        %v312 = vsub.s32 %v309, %v311
        %v313 = vrot.slane %v265, %v312
        %vm314 = vcmask 261312
        %v315 = vsel %vm314, %v313, %v308
        %v321 = vlaneseq
        %v322 = vshrl.u32 %v321, 7
        %v323 = vsub.s32 %v290, %v322
        %v324 = vrot.slane %v268, %v323
        %v325 = vlaneseq
        %v326 = vshrl.u32 %v325, 7
        %v327 = vsub.s32 %v295, %v326
        %v328 = vrot.slane %v271, %v327
        %v329 = vsel %vm300, %v328, %v324
        %v330 = vlaneseq
        %v331 = vshrl.u32 %v330, 7
        %v332 = vsub.s32 %v302, %v331
        %v333 = vrot.slane %v274, %v332
        %v334 = vsel %vm307, %v333, %v329
        %v335 = vlaneseq
        %v336 = vshrl.u32 %v335, 7
        %v337 = vsub.s32 %v309, %v336
        %v338 = vrot.slane %v277, %v337
        %v339 = vsel %vm314, %v338, %v334
        %vm341 = vcmask 1040384
        %v342 = vsel %vm341, %v315, %v339
        %v344 = vlaneseq
        %v345 = vshrl.u32 %v344, 7
        %v346 = vsub.s32 0, %v345
        %v347 = vrot.slane %v282, %v346
        %vm349 = vcmask 261120
        %v351 = vsel %vm349, %v342, 0
        %353 = vmatprep.subr.mxu0 0.0
        %354 = vmatpush1.msra.mxu0 %v278
        %355 = vmatprep.subr.mxu0 0.0
        %356 = vmatpush1.msra.mxu0 %v279
        %357 = vmatprep.subr.mxu0 0.0
        %358 = vmatpush1.msra.mxu0 %v280
        %359 = vmatprep.subr.mxu0 0.0
        %360 = vmatpush1.msra.mxu0 %v281
        %361 = vmatprep.subr.mxu0 0.0
        %362 = vmatpush1.msra.mxu0 0.0
        %363 = vmatprep.subr.mxu0 0.0
        %364 = vmatpush1.msra.mxu0 0.0
        %365 = vmatprep.subr.mxu0 0.0
        %366 = vmatpush1.msra.mxu0 0.0
        %367 = vmatprep.subr.mxu0 0.0
        %368 = vmatpush1.msra.mxu0 0.0
        %369 = vmatprep.subr.mxu0 0.0
        %370 = vmatpush1.msra.mxu0 0.0
        %371 = vmatprep.subr.mxu0 0.0
        %372 = vmatpush1.msra.mxu0 0.0
        %373 = vmatprep.subr.mxu0 0.0
        %374 = vmatpush1.msra.mxu0 0.0
        %375 = vmatprep.subr.mxu0 0.0
        %376 = vmatpush1.msra.mxu0 0.0
        %377 = vmatprep.subr.mxu0 0.0
        %378 = vmatpush1.msra.mxu0 0.0
        %379 = vmatprep.subr.mxu0 0.0
        %380 = vmatpush1.msra.mxu0 0.0
        %381 = vmatprep.subr.mxu0 0.0
        %382 = vmatpush1.msra.mxu0 0.0
        %383 = vmatprep.subr.mxu0 0.0
        %384 = vmatpush1.msra.mxu0 0.0
        %385 = vmatprep.subr.mxu0 0.0
        %386 = vmatpush1.msra.mxu0 0.0
        %387 = vmatprep.subr.mxu0 0.0
        %388 = vmatpush1.msra.mxu0 0.0
        %389 = vmatprep.subr.mxu0 0.0
        %390 = vmatpush1.msra.mxu0 0.0
        %391 = vmatprep.subr.mxu0 0.0
        %392 = vmatpush1.msra.mxu0 0.0
        %393 = vmatprep.subr.mxu0 0.0
        %394 = vmatpush1.msra.mxu0 0.0
        %395 = vmatprep.subr.mxu0 0.0
        %396 = vmatpush1.msra.mxu0 0.0
        %397 = vmatprep.subr.mxu0 0.0
        %398 = vmatpush1.msra.mxu0 0.0
        %399 = vmatprep.subr.mxu0 0.0
        %400 = vmatpush1.msra.mxu0 0.0
        %401 = vmatprep.subr.mxu0 0.0
        %402 = vmatpush1.msra.mxu0 0.0
        %403 = vmatprep.subr.mxu0 0.0
        %404 = vmatpush1.msra.mxu0 0.0
        %405 = vmatprep.subr.mxu0 0.0
        %406 = vmatpush1.msra.mxu0 0.0
        %407 = vmatprep.subr.mxu0 0.0
        %408 = vmatpush1.msra.mxu0 0.0
        %409 = vmatprep.subr.mxu0 0.0
        %410 = vmatpush1.msra.mxu0 0.0
        %411 = vmatprep.subr.mxu0 0.0
        %412 = vmatpush1.msra.mxu0 0.0
        %413 = vmatprep.subr.mxu0 0.0
        %414 = vmatpush1.msra.mxu0 0.0
        %415 = vmatprep.subr.mxu0 0.0
        %416 = vmatpush1.msra.mxu0 0.0
        %417 = vmatprep.mubr.f32.mxu0 0.0
        %418 = vmatmul.mubr.f32.gmra.mrb[0].mxu0 %v351
        %v419 = vpop.f32.mrb[0].mxu0
        %v420 = vadd.f32 %v347, %v419
        %v421 = vpop.f32.mrb[0].mxu0
        %422 = vdwg.mxu0
        %v423 = vmax.f32 %v420, 0.0
        %v425 = vlaneseq
        %v426 = vshrl.u32 %v425, 7
        %v427 = vsub.s32 0, %v426
        %v428 = vrot.slane %v284, %v427
        %vm430 = vcmask 15360
        %v432 = vsel %vm430, %v423, 0
        %vm434 = vcmask 1041408
        %v436 = vsel %vm434, %v283, 0
        %438 = vmatprep.subr.mxu0 0.0
        %439 = vmatpush1.msra.mxu0 %v436
        %440 = vmatprep.subr.mxu0 0.0
        %441 = vmatpush1.msra.mxu0 0.0
        %442 = vmatprep.subr.mxu0 0.0
        %443 = vmatpush1.msra.mxu0 0.0
        %444 = vmatprep.subr.mxu0 0.0
        %445 = vmatpush1.msra.mxu0 0.0
        %446 = vmatprep.subr.mxu0 0.0
        %447 = vmatpush1.msra.mxu0 0.0
        %448 = vmatprep.subr.mxu0 0.0
        %449 = vmatpush1.msra.mxu0 0.0
        %450 = vmatprep.subr.mxu0 0.0
        %451 = vmatpush1.msra.mxu0 0.0
        %452 = vmatprep.subr.mxu0 0.0
        %453 = vmatpush1.msra.mxu0 0.0
        %454 = vmatprep.subr.mxu0 0.0
        %455 = vmatpush1.msra.mxu0 0.0
        %456 = vmatprep.subr.mxu0 0.0
        %457 = vmatpush1.msra.mxu0 0.0
        %458 = vmatprep.subr.mxu0 0.0
        %459 = vmatpush1.msra.mxu0 0.0
        %460 = vmatprep.subr.mxu0 0.0
        %461 = vmatpush1.msra.mxu0 0.0
        %462 = vmatprep.subr.mxu0 0.0
        %463 = vmatpush1.msra.mxu0 0.0
        %464 = vmatprep.subr.mxu0 0.0
        %465 = vmatpush1.msra.mxu0 0.0
        %466 = vmatprep.subr.mxu0 0.0
        %467 = vmatpush1.msra.mxu0 0.0
        %468 = vmatprep.subr.mxu0 0.0
        %469 = vmatpush1.msra.mxu0 0.0
        %470 = vmatprep.subr.mxu0 0.0
        %471 = vmatpush1.msra.mxu0 0.0
        %472 = vmatprep.subr.mxu0 0.0
        %473 = vmatpush1.msra.mxu0 0.0
        %474 = vmatprep.subr.mxu0 0.0
        %475 = vmatpush1.msra.mxu0 0.0
        %476 = vmatprep.subr.mxu0 0.0
        %477 = vmatpush1.msra.mxu0 0.0
        %478 = vmatprep.subr.mxu0 0.0
        %479 = vmatpush1.msra.mxu0 0.0
        %480 = vmatprep.subr.mxu0 0.0
        %481 = vmatpush1.msra.mxu0 0.0
        %482 = vmatprep.subr.mxu0 0.0
        %483 = vmatpush1.msra.mxu0 0.0
        %484 = vmatprep.subr.mxu0 0.0
        %485 = vmatpush1.msra.mxu0 0.0
        %486 = vmatprep.subr.mxu0 0.0
        %487 = vmatpush1.msra.mxu0 0.0
        %488 = vmatprep.subr.mxu0 0.0
        %489 = vmatpush1.msra.mxu0 0.0
        %490 = vmatprep.subr.mxu0 0.0
        %491 = vmatpush1.msra.mxu0 0.0
        %492 = vmatprep.subr.mxu0 0.0
        %493 = vmatpush1.msra.mxu0 0.0
        %494 = vmatprep.subr.mxu0 0.0
        %495 = vmatpush1.msra.mxu0 0.0
        %496 = vmatprep.subr.mxu0 0.0
        %497 = vmatpush1.msra.mxu0 0.0
        %498 = vmatprep.subr.mxu0 0.0
        %499 = vmatpush1.msra.mxu0 0.0
        %500 = vmatprep.subr.mxu0 0.0
        %501 = vmatpush1.msra.mxu0 0.0
        %502 = vmatprep.mubr.f32.mxu0 0.0
        %503 = vmatmul.mubr.f32.gmra.mrb[0].mxu0 %v432
        %v504 = vpop.f32.mrb[0].mxu0
        %v505 = vadd.f32 %v428, %v504
        %v506 = vpop.f32.mrb[0].mxu0
        %507 = vdwg.mxu0
        %v509 = vrot.slane %v505, 1
        %v511 = vadd.f32 %v505, %v509
        %v512 = vxor.u32 %v511, 2147483648
        %v513 = vmul.f32 %v512, 1.442695
        %v514 = vpow.pop %v513
        %v515 = vadd.f32 %v514, 1.0
        %v516 = vrcp.pop %v515
        %v517 = vmul.f32 1.0, %v516
        %vm518 = vcmask 253952
        %519 = vst.msk [vmem:[%s241] sm:$0x1] %vm518, %v517
        %s520 = sand.u32 %s140, 1
        %s521 = scalar_lea.sflag [#allocation4], %s520
        %s522 = sand.u32 %s140, 1
        %s523 = scalar_lea.vmem [#allocation5], %s522
        // Predicated region
        $region45: #{tpu_custom_call.1} parent=39 // pred_check
          %p524 = pneg %p150
        $region46: #{tpu_custom_call.1} parent=39 // pred_check_branch
          %526 = sbr.rel (%p524) target = $region48
        $region47: #{tpu_custom_call.1} parent=39 // pred_region
          %s528 = ssub.s32 16, 16
          %529 = vsyncadd %s521, %s528
          %s530 = smul.addr %s22, 16
          %s531 = scalar_lea.hbm %s5, %s530
          %s533 = sshll.u32 %s523, 4
          %s534 = int_to_ptr.vmem [resolvable:$true] %s533
          %536 = dma.vmem_to_hbm [thread:$0]  %s534, 16, %s531, %s521
        $region48: #{tpu_custom_call.1} parent=39 // pred_fallthru
          _
      $region40: #{tpu_custom_call.1} parent=5 // pred_fallthru
        _
      %p537 = scmp.le.s32.totalorder 2, %s17
      // Predicated region
      $region49: #{tpu_custom_call.1} parent=5 // pred_check
        %p538 = pneg %p537
      $region50: #{tpu_custom_call.1} parent=5 // pred_check_branch
        %540 = sbr.rel (%p538) target = $region52
      $region51: #{tpu_custom_call.1} parent=5 // pred_region
        %s541 = ssub.s32 %s17, 2
        // Predicated region
        $region53: #{tpu_custom_call.1} parent=51 // pred_check
          %p542 = pneg %p156
        $region54: #{tpu_custom_call.1} parent=51 // pred_check_branch
          %544 = sbr.rel (%p542) target = $region56
        $region55: #{tpu_custom_call.1} parent=51 // pred_region
          %s545 = sand.u32 %s141, 1
          %s546 = scalar_lea.sflag [#allocation4], %s545
          %s547 = sand.u32 %s141, 1
          %s548 = scalar_lea.vmem [#allocation5], %s547
          %549 = dma.done %s546, 16
        $region56: #{tpu_custom_call.1} parent=51 // pred_fallthru
          _
      $region52: #{tpu_custom_call.1} parent=5 // pred_fallthru
        _
    $region6: #{tpu_custom_call.1} parent=1 // loop_footer
      %s21 = sadd.s32 1, %s17
    $region7: #{tpu_custom_call.1} parent=1 // loop_footer_branch
      %16 = sbr.rel target = $region3
    $region8: #{tpu_custom_call.1} parent=1 // loop_exit
      _
    %550 = vsyncpa [#allocation3], 1
    %s551 = scalar_lea.sflag [#allocation3], 1
    %552 = vsyncpa %s551, 1
    %553 = vsyncpa [#allocation4], 1
    %s554 = scalar_lea.sflag [#allocation4], 1
    %555 = vsyncpa %s554, 1

</llo_original>
